<compile_context>
chip_gen: v6e
topology: v6e:2x2x1
jax: 0.10.0
libtpu: 0.0.40
codegen_flags: <defaults>
</compile_context>

<pallas_src>
import jax
import jax.numpy as jnp
from jax import lax
from jax.experimental import pallas as pl
from jax.experimental.pallas import tpu as pltpu


# Vertex-chunk depth of the one-hot gather contraction.  256 matches the
# 2x256^2 MXU contraction depth on v6e/v7x.
# TODO(synk): use 128 on v5e (4x128^2 MXU, single vector-store slot).
_V_CHUNK = 256
# Up to this many chunks the loop is statically unrolled; beyond it we use a
# lax.fori_loop so only ~one one-hot slab is live at a time.
_MAX_STATIC_CHUNKS = 4


def _gaussian_edge_kernel(idx_ref, posT_ref, sigma_ref, out_ref):
    # idx_ref:   (2, TE)   int32   VMEM  -- edge endpoint indices for this tile
    # posT_ref:  (D, Vp)   float32 VMEM  -- full (transposed, V-padded) positions
    # sigma_ref: (1,)      float32 SMEM  -- inverse_sigma parameter (scalar)
    # out_ref:   (1, TE)   float32 VMEM  -- gaussian edge weights for this tile
    d, v = posT_ref.shape
    te = idx_ref.shape[1]
    v_chunk = v if v <= _V_CHUNK else _V_CHUNK
    n_chunks = v // v_chunk          # wrapper pads V to a multiple of v_chunk

    src = idx_ref[0:1, :]            # [1, TE] int32
    dst = idx_ref[1:2, :]            # [1, TE] int32

    # Hoisted: one [Vc, TE] iota per kernel invocation; the per-chunk offset is
    # folded into the cheap [1, TE] scalar side of the compare.
    iota = lax.broadcasted_iota(jnp.int32, (v_chunk, te), 0)

    def signed_one_hot(c0):
        # +1 at the source vertex row, -1 at the destination vertex row, so a
        # single MXU matmul produces p_src - p_dst directly.
        # NOTE: out-of-range vertex indices never match -> diff 0 -> weight 1.0
        # (the PyTorch module would raise instead).
        return ((iota == (src - c0)).astype(jnp.float32)
                - (iota == (dst - c0)).astype(jnp.float32))     # [Vc, TE]

    # Chunk 0 initializes the accumulator directly (no zeros + add).
    first = posT_ref[...] if n_chunks == 1 else posT_ref[:, pl.ds(0, v_chunk)]
    diff = jnp.dot(first, signed_one_hot(0),
                   preferred_element_type=jnp.float32)          # [D, TE]

    if n_chunks > 1:
        if n_chunks <= _MAX_STATIC_CHUNKS:
            for c in range(1, n_chunks):                        # static unroll
                c0 = c * v_chunk
                diff = diff + jnp.dot(posT_ref[:, c0:c0 + v_chunk],
                                      signed_one_hot(c0),
                                      preferred_element_type=jnp.float32)
        else:
            def chunk_step(c, acc):
                c0 = c * v_chunk
                start = pl.multiple_of(c0, 128)                 # aligned lane slice
                return acc + jnp.dot(posT_ref[:, pl.ds(start, v_chunk)],
                                     signed_one_hot(c0),
                                     preferred_element_type=jnp.float32)
            diff = lax.fori_loop(1, n_chunks, chunk_step, diff, unroll=2)

    d2 = jnp.sum(diff * diff, axis=0, keepdims=True)            # [1, TE] squared L2
    inv_sigma = sigma_ref[0]                                    # SMEM scalar read
    out_ref[...] = jnp.exp(-(inv_sigma * d2))                   # [1, TE]


def _vmem_limit_bytes(v_pad, te, v_chunk):
    """Footprint-derived VMEM limit, capped by the queried per-core capacity."""
    sub = 8                                   # sublane padding of small leading dims
    posT_bytes = sub * v_pad * 4              # single-buffered (pl.Buffered(1))
    idx_bytes = 2 * (sub * te * 4)            # (2, te) i32 tile, double-buffered
    out_bytes = 2 * (sub * te * 4)            # (1, te) f32 tile, double-buffered
    onehot_bytes = 2 * v_chunk * te * 4       # <= 2 live one-hot slabs (unroll=2)
    headroom = 4 * 1024 * 1024
    need = posT_bytes + idx_bytes + out_bytes + onehot_bytes + headroom
    try:
        # ~3/4 of per-core VMEM: ~48 MiB on v7x (64 MiB/TC), capped at 96 MiB on
        # v5e/v6e (128 MiB).
        cap = min(int(pltpu.get_tpu_info().vmem_capacity_bytes) * 3 // 4,
                  96 * 1024 * 1024)
    except Exception:
        cap = 48 * 1024 * 1024                # safe on every current chip
    return int(min(max(need, 16 * 1024 * 1024), cap))


def gaussian_kernel_distance(edge_idxs, pos, inverse_sigma, *, tile_edges=None):
    """edge_idxs: [2, E] int, pos: [V, D] float, inverse_sigma: shape-(1,) param.

    Returns edge_weights of shape [E] (same values as the PyTorch forward).
    """
    num_edges = edge_idxs.shape[1]
    num_vertices, num_dims = pos.shape

    if num_edges == 0:                        # degenerate graph
        return jnp.zeros((0,), jnp.float32)

    # ---- edge (lane) tiling -------------------------------------------------
    e128 = pl.cdiv(num_edges, 128) * 128
    if tile_edges is None:
        # Small vertex tables are overhead-dominated at small tiles: use a big
        # edge tile; large tables keep the one-hot slab bounded at te=512.
        tile_edges = 2048 if num_vertices <= 2048 else 512
    te = min(int(tile_edges), e128)
    if e128 >= 256:
        # Keep the grid >= 2 so dimension_semantics=("parallel",) can split the
        # edge tiles across both v7x TensorCores.
        te = min(te, max(128, ((e128 // 2) // 128) * 128))
    te = max(128, (te // 128) * 128)
    padded_edges = pl.cdiv(num_edges, te) * te

    edge_idxs = edge_idxs.astype(jnp.int32)
    if padded_edges != num_edges:
        # Padded slots gather vertex 0 twice -> weight exp(0)=1.0; sliced off below.
        edge_idxs = jnp.pad(edge_idxs, ((0, 0), (0, padded_edges - num_edges)))

    # ---- vertex (contraction) padding ---------------------------------------
    v_chunk = num_vertices if num_vertices <= _V_CHUNK else _V_CHUNK
    v_pad = pl.cdiv(num_vertices, v_chunk) * v_chunk
    posT = jnp.transpose(pos).astype(jnp.float32)                  # [D, V] (glue)
    if v_pad != num_vertices:
        # Zero columns; no valid index ever selects them, so they never contribute.
        posT = jnp.pad(posT, ((0, 0), (0, v_pad - num_vertices)))
    sigma = jnp.asarray(inverse_sigma, jnp.float32).reshape(1)     # SMEM scalar

    grid = (padded_edges // te,)
    out = pl.pallas_call(
        _gaussian_edge_kernel,
        out_shape=jax.ShapeDtypeStruct((1, padded_edges), jnp.float32),
        grid_spec=pltpu.PrefetchScalarGridSpec(
            num_scalar_prefetch=0,
            grid=grid,
            in_specs=[
                pl.BlockSpec((2, te), lambda i: (0, i)),              # edge idx tile
                # Grid-invariant position table: single-buffer it (double
                # buffering a constant block only wastes VMEM).
                pl.BlockSpec((num_dims, v_pad), lambda i: (0, 0),
                             pipeline_mode=pl.Buffered(1)),
                pl.BlockSpec(memory_space=pltpu.MemorySpace.SMEM),    # inverse_sigma
            ],
            out_specs=pl.BlockSpec((1, te), lambda i: (0, i)),
        ),
        compiler_params=pltpu.CompilerParams(
            dimension_semantics=("parallel",),   # edge tiles independent -> megacore
            vmem_limit_bytes=_vmem_limit_bytes(v_pad, te, v_chunk),
        ),
    )(edge_idxs, posT, sigma)
    return out.reshape(padded_edges)[:num_edges]


if __name__ == "__main__":
    key = jax.random.PRNGKey(0)
    k_sigma, k_pos1, k_edge1, k_pos2, k_edge2 = jax.random.split(key, 5)

    # Deterministic parameter init mirroring: torch.rand(1) * 0.02 + 0.99
    inverse_sigma = jax.random.uniform(k_sigma, (1,), jnp.float32) * 0.02 + 0.99

    def reference(edge_idxs, pos):
        # Plain-JAX reference with the same semantics as the PyTorch forward.
        edge_positions = pos[edge_idxs]                         # [2, E, D]
        dist = jnp.linalg.norm(edge_positions[0] - edge_positions[1], axis=-1)
        return jnp.exp(-(inverse_sigma[0] * dist ** 2))         # [E]

    # Case 1: small vertex table (single-chunk gather, big edge-tile path).
    # num_edges is a non-multiple of the tile (exercises pad/slice) and large
    # enough for a grid of >= 2 (both v7x TensorCores get work).
    v1, d1, e1 = 64, 3, 1000
    pos1 = jax.random.normal(k_pos1, (v1, d1), jnp.float32)
    idx1 = jax.random.randint(k_edge1, (2, e1), 0, v1, jnp.int32)
    out1 = jax.block_until_ready(gaussian_kernel_distance(idx1, pos1, inverse_sigma))
    assert out1.shape == (e1,)
    assert jnp.allclose(out1, reference(idx1, pos1), atol=1e-5, rtol=1e-5)

    # Case 2: larger vertex table (> _MAX_STATIC_CHUNKS * _V_CHUNK) to exercise
    # the fori_loop chunked contraction and the posT vertex-padding path.
    v2, d2, e2 = 1500, 3, 1000
    pos2 = jax.random.normal(k_pos2, (v2, d2), jnp.float32)
    idx2 = jax.random.randint(k_edge2, (2, e2), 0, v2, jnp.int32)
    out2 = jax.block_until_ready(gaussian_kernel_distance(idx2, pos2, inverse_sigma))
    assert out2.shape == (e2,)
    assert jnp.allclose(out2, reference(idx2, pos2), atol=1e-5, rtol=1e-5)

    print("KERNEL_OK")
</pallas_src>

<mosaic_0001>
module attributes {stable_mosaic.version = 11 : i64} {
  func.func @_gaussian_edge_kernel(%arg0: i32, %arg1: memref<2x512xi32, #tpu.memory_space<vmem>>, %arg2: memref<3x64xf32, #tpu.memory_space<vmem>>, %arg3: memref<1xf32, #tpu.memory_space<smem>>, %arg4: memref<1x512xf32, #tpu.memory_space<vmem>>) attributes {dimension_semantics = [#tpu.dimension_semantics<parallel>], iteration_bounds = array<i64: 2>, scalar_prefetch = 0 : i64, scratch_operands = 0 : i64, tpu.core_type = #tpu.core_type<tc>, window_params = [{transform_indices = @transform_0, window_bounds = array<i64: 2, 512>}, {pipeline_mode = #tpu.pipeline_mode<synchronous>, transform_indices = @transform_1, window_bounds = array<i64: 3, 64>}, {transform_indices = @transform_2, window_bounds = array<i64: 1>}, {transform_indices = @transform_3, window_bounds = array<i64: 1, 512>}]} {
    %c0 = arith.constant 0 : index
    %c0_0 = arith.constant 0 : index
    %0 = vector.load %arg1[%c0, %c0_0] : memref<2x512xi32, #tpu.memory_space<vmem>>, vector<1x512xi32>
    %c1 = arith.constant 1 : index
    %c0_1 = arith.constant 0 : index
    %1 = vector.load %arg1[%c1, %c0_1] : memref<2x512xi32, #tpu.memory_space<vmem>>, vector<1x512xi32>
    %2 = tpu.iota {dimensions = array<i32: 0>} : vector<64x512xi32>
    %c0_2 = arith.constant 0 : index
    %c0_3 = arith.constant 0 : index
    %3 = vector.load %arg2[%c0_2, %c0_3] : memref<3x64xf32, #tpu.memory_space<vmem>>, vector<3x64xf32>
    %c0_i32 = arith.constant 0 : i32
    %4 = vector.broadcast %c0_i32 : i32 to vector<1x512xi32>
    %5 = arith.subi %0, %4 : vector<1x512xi32>
    %6 = vector.broadcast %5 : vector<1x512xi32> to vector<64x512xi32>
    %7 = arith.cmpi eq, %2, %6 : vector<64x512xi32>
    %8 = arith.extui %7 : vector<64x512xi1> to vector<64x512xi32>
    %9 = arith.sitofp %8 : vector<64x512xi32> to vector<64x512xf32>
    %c0_i32_4 = arith.constant 0 : i32
    %10 = vector.broadcast %c0_i32_4 : i32 to vector<1x512xi32>
    %11 = arith.subi %1, %10 : vector<1x512xi32>
    %12 = vector.broadcast %11 : vector<1x512xi32> to vector<64x512xi32>
    %13 = arith.cmpi eq, %2, %12 : vector<64x512xi32>
    %14 = arith.extui %13 : vector<64x512xi1> to vector<64x512xi32>
    %15 = arith.sitofp %14 : vector<64x512xi32> to vector<64x512xf32>
    %16 = arith.subf %9, %15 : vector<64x512xf32>
    %cst = arith.constant dense<0.000000e+00> : vector<3x512xf32>
    %17 = tpu.matmul %3, %16, %cst {dimension_numbers = #tpu.dot_dimension_numbers<[1], [0], [0], [1], [0, 0, 1, 1], [], []>} : vector<3x64xf32>, vector<64x512xf32>, vector<3x512xf32> -> vector<3x512xf32>
    %18 = arith.mulf %17, %17 : vector<3x512xf32>
    %cst_5 = arith.constant dense<0.000000e+00> : vector<512xf32>
    %19 = vector.multi_reduction <add>, %18, %cst_5 [0] : vector<3x512xf32> to vector<512xf32>
    %20 = vector.shape_cast %19 : vector<512xf32> to vector<1x512xf32>
    %c0_6 = arith.constant 0 : index
    %21 = memref.load %arg3[%c0_6] : memref<1xf32, #tpu.memory_space<smem>>
    %22 = vector.broadcast %21 : f32 to vector<1x512xf32>
    %23 = arith.mulf %22, %20 : vector<1x512xf32>
    %cst_7 = arith.constant 0.000000e+00 : f32
    %24 = vector.broadcast %cst_7 : f32 to vector<1x512xf32>
    %25 = arith.subf %24, %23 : vector<1x512xf32>
    %26 = math.exp %25 : vector<1x512xf32>
    %c0_8 = arith.constant 0 : index
    %c0_9 = arith.constant 0 : index
    %27 = vector.load %arg4[%c0_8, %c0_9] : memref<1x512xf32, #tpu.memory_space<vmem>>, vector<1x512xf32>
    tpu.vector_store %arg4[%c0_8, %c0_9], %26 {strides = array<i32>} : memref<1x512xf32, #tpu.memory_space<vmem>>, vector<1x512xf32>,
    return
  }
  func.func @transform_0(%arg0: i32) -> (i32, i32) {
    %c0_i32 = arith.constant 0 : i32
    %c0_i32_0 = arith.constant 0 : i32
    return %c0_i32, %arg0 : i32, i32
  }
  func.func @transform_1(%arg0: i32) -> (i32, i32) {
    %c0_i32 = arith.constant 0 : i32
    %c0_i32_0 = arith.constant 0 : i32
    %c0_i32_1 = arith.constant 0 : i32
    return %c0_i32, %c0_i32_0 : i32, i32
  }
  func.func @transform_2(%arg0: i32) -> i32 {
    %c0_i32 = arith.constant 0 : i32
    %c0_i32_0 = arith.constant 0 : i32
    return %c0_i32 : i32
  }
  func.func @transform_3(%arg0: i32) -> (i32, i32) {
    %c0_i32 = arith.constant 0 : i32
    %c0_i32_0 = arith.constant 0 : i32
    return %c0_i32, %arg0 : i32, i32
  }
}

</mosaic_0001>

<llo_original>
// kernel: tpu_custom_call.1
$region0: #{tpu_custom_call.1}
  #allocation0 [shape = 'u32[]', space=smem, size = 0x4, offset = 0x4, fixed_abs, tag = 'smem constant byte address 0x4 - core index']
  #allocation1 [shape = 'u32[144,128]{1,0:T(1,128)}', space=vmem, size = 0x12000, scoped, tag = 'internal scratch']
  #allocation2 [shape = 'f32[1]{0:T(128)S(6)}', space=smem, size = 0x200, scoped, tag = 'scoped memory for tpu_custom_call.1']
  %s0 = inlined_call_operand.hbm [shape: s32[2,1024], index: 0, kind: input, shape index: {}]
  %s1 = inlined_call_operand.hbm [shape: f32[3,64], index: 1, kind: input, shape index: {}]
  %s2 = inlined_call_operand.<no memory space> [shape: f32[1], index: 2, kind: input, shape index: {}]
  %s3 = inlined_call_operand.hbm [shape: f32[1,1024], index: 3, kind: output, shape index: {}]
  %s4 = sld [smem:[#allocation0]]
  $region53: #{tpu_custom_call.1} parent=0
    _
  %s6 = ssub.s32 1, %s4
  %s7 = scalar_select 0, %s6, %s4
  %8 = sst [smem:[#allocation2]] %s2
  $region1: #{tpu_custom_call.1} parent=0
    #allocation3 [shape = 'u8[8192]{0}', space=vmem, size = 0x2000, scoped, tag = 'input window, operand 0']
    #allocation4 [shape = 's32[2]{0}', space=sflag, size = 0x8, scoped, tag = 'scoped memory for tpu_custom_call.1']
    #allocation5 [shape = 's32[2]{0}', space=sflag, size = 0x8, scoped, tag = 'scoped memory for tpu_custom_call.1']
    #allocation6 [shape = 'u8[2048]{0}', space=vmem, size = 0x800, scoped, tag = 'input window, operand 1, single buffered']
    #allocation7 [shape = 's32[1]{0}', space=sflag, size = 0x4, scoped, tag = 'scoped memory for tpu_custom_call.1']
    #allocation8 [shape = 'u8[4096]{0}', space=vmem, size = 0x1000, scoped, tag = 'output window, operand 0']
    %9 = vsyncpa [#allocation4], 0
    %s10 = scalar_lea.sflag [#allocation4], 1
    %11 = vsyncpa %s10, 0
    %12 = vsyncpa [#allocation7], 0
    %13 = vsyncpa [#allocation5], 0
    %s14 = scalar_lea.sflag [#allocation5], 1
    %15 = vsyncpa %s14, 0
    loop: start=0, step=1, limit=4
    $region2: #{tpu_custom_call.1} parent=1 // loop_pre_header
      _
    $region3: #{tpu_custom_call.1} parent=1 // loop_header
      %s17 = sphi 0, %s21
      %p18 = scmp.ge.s32.totalorder %s17, 4
      %s27 = sphi 0, %s29
      %s30 = sphi 0, %s27
      %s31 = sphi 0, %s30
      %s47 = sphi 0, %s31
      %s51 = sphi 0, %s51
      %s53 = sphi 0, %s51
      %s54 = sphi 0, %s53
      %s68 = sphi 0, %s54
      %s72 = sphi 0, %s72
      %s74 = sphi 0, %s72
      %s75 = sphi 0, %s74
      %s89 = sphi 0, %s75
      %s95 = sphi 0, %s97
      %s98 = sphi 0, %s95
      %s99 = sphi 0, %s98
      %s115 = sphi 0, %s99
    $region4: #{tpu_custom_call.1} parent=1 // loop_header_branch
      %20 = sbr.rel (%p18) target = $region8
    $region5: #{tpu_custom_call.1} parent=1 // loop_body
      %s22 = ssub.s32 %s17, 1
      %s23 = ssub.s32 %s17, 2
      %s24 = sadd.s32 %s17, 1
      %s25 = ssub.s32 %s17, %s24
      %p26 = scmp.eq.s32.totalorder %s25, 0
      %s28 = sadd.s32 %s27, 1
      %s29 = scalar_select %p26, %s27, %s28
      %p32 = pneg %p26
      %p33 = scmp.eq.s32.totalorder %s17, 1
      %p34 = por %p32, %p33
      %p35 = scmp.ne.s32.totalorder %s27, %s30
      %p36 = scmp.eq.s32.totalorder %s17, 0
      %p37 = por %p35, %p36
      %p38 = scmp.ne.s32.totalorder %s27, %s30
      %p39 = scmp.eq.s32.totalorder %s22, 1
      %p40 = por %p38, %p39
      %p41 = scmp.ne.s32.totalorder %s30, %s31
      %p42 = scmp.eq.s32.totalorder %s22, 0
      %p43 = por %p41, %p42
      %p44 = scmp.ne.s32.totalorder %s30, %s31
      %p45 = scmp.eq.s32.totalorder %s23, 1
      %p46 = por %p44, %p45
      %p48 = scmp.ne.s32.totalorder %s31, %s47
      %p49 = scmp.eq.s32.totalorder %s23, 0
      %p50 = por %p48, %p49
      %s52 = sadd.s32 %s51, 1
      %p55 = scmp.eq.s32.totalorder %s17, 1
      %p56 = scmp.ne.s32.totalorder %s51, %s53
      %p57 = scmp.eq.s32.totalorder %s17, 0
      %p58 = por %p56, %p57
      %p59 = scmp.ne.s32.totalorder %s51, %s53
      %p60 = scmp.eq.s32.totalorder %s22, 1
      %p61 = por %p59, %p60
      %p62 = scmp.ne.s32.totalorder %s53, %s54
      %p63 = scmp.eq.s32.totalorder %s22, 0
      %p64 = por %p62, %p63
      %p65 = scmp.ne.s32.totalorder %s53, %s54
      %p66 = scmp.eq.s32.totalorder %s23, 1
      %p67 = por %p65, %p66
      %p69 = scmp.ne.s32.totalorder %s54, %s68
      %p70 = scmp.eq.s32.totalorder %s23, 0
      %p71 = por %p69, %p70
      %s73 = sadd.s32 %s72, 1
      %p76 = scmp.eq.s32.totalorder %s17, 1
      %p77 = scmp.ne.s32.totalorder %s72, %s74
      %p78 = scmp.eq.s32.totalorder %s17, 0
      %p79 = por %p77, %p78
      %p80 = scmp.ne.s32.totalorder %s72, %s74
      %p81 = scmp.eq.s32.totalorder %s22, 1
      %p82 = por %p80, %p81
      %p83 = scmp.ne.s32.totalorder %s74, %s75
      %p84 = scmp.eq.s32.totalorder %s22, 0
      %p85 = por %p83, %p84
      %p86 = scmp.ne.s32.totalorder %s74, %s75
      %p87 = scmp.eq.s32.totalorder %s23, 1
      %p88 = por %p86, %p87
      %p90 = scmp.ne.s32.totalorder %s75, %s89
      %p91 = scmp.eq.s32.totalorder %s23, 0
      %p92 = por %p90, %p91
      %s93 = ssub.s32 %s17, %s24
      %p94 = scmp.eq.s32.totalorder %s93, 0
      %s96 = sadd.s32 %s95, 1
      %s97 = scalar_select %p94, %s95, %s96
      %p100 = pneg %p94
      %p101 = scmp.eq.s32.totalorder %s17, 1
      %p102 = por %p100, %p101
      %p103 = scmp.ne.s32.totalorder %s95, %s98
      %p104 = scmp.eq.s32.totalorder %s17, 0
      %p105 = por %p103, %p104
      %p106 = scmp.ne.s32.totalorder %s95, %s98
      %p107 = scmp.eq.s32.totalorder %s22, 1
      %p108 = por %p106, %p107
      %p109 = scmp.ne.s32.totalorder %s98, %s99
      %p110 = scmp.eq.s32.totalorder %s22, 0
      %p111 = por %p109, %p110
      %p112 = scmp.ne.s32.totalorder %s98, %s99
      %p113 = scmp.eq.s32.totalorder %s23, 1
      %p114 = por %p112, %p113
      %p116 = scmp.ne.s32.totalorder %s99, %s115
      %p117 = scmp.eq.s32.totalorder %s23, 0
      %p118 = por %p116, %p117
      %p119 = scmp.le.s32.totalorder 1, %s17
      %p120 = scmp.lt.s32.totalorder %s17, 3
      %p121 = pnand %p119, %p120
      %p122 = pneg %p121
      // Predicated region
      $region9: #{tpu_custom_call.1} parent=5 // pred_check
        _
      $region10: #{tpu_custom_call.1} parent=5 // pred_check_branch
        %124 = sbr.rel (%p121) target = $region12
      $region11: #{tpu_custom_call.1} parent=5 // pred_region
        %s125 = ssub.s32 %s17, 1
        // Predicated region
        $region13: #{tpu_custom_call.1} parent=11 // pred_check
          %p126 = pneg %p64
        $region14: #{tpu_custom_call.1} parent=11 // pred_check_branch
          %128 = sbr.rel (%p126) target = $region16
        $region15: #{tpu_custom_call.1} parent=11 // pred_region
          %s130 = ssub.s32 64, 64
          %131 = vsyncadd [#allocation7], %s130
          %s133 = sshll.u32 [#allocation6], 4
          %s134 = int_to_ptr.vmem [resolvable:$true] %s133
          %136 = dma.hbm_to_vmem [thread:$0]  %s1, 64, %s134, [#allocation7]
        $region16: #{tpu_custom_call.1} parent=11 // pred_fallthru
          _
        // Predicated region
        $region17: #{tpu_custom_call.1} parent=11 // pred_check
          %p137 = pneg %p85
        $region18: #{tpu_custom_call.1} parent=11 // pred_check_branch
          %139 = sbr.rel (%p137) target = $region20
        $region19: #{tpu_custom_call.1} parent=11 // pred_region
          _
        $region20: #{tpu_custom_call.1} parent=11 // pred_fallthru
          _
      $region12: #{tpu_custom_call.1} parent=5 // pred_fallthru
        _
      %p140 = scmp.lt.s32.totalorder %s17, 2
      // Predicated region
      $region21: #{tpu_custom_call.1} parent=5 // pred_check
        %p141 = pneg %p140
      $region22: #{tpu_custom_call.1} parent=5 // pred_check_branch
        %143 = sbr.rel (%p141) target = $region24
      $region23: #{tpu_custom_call.1} parent=5 // pred_region
        // Predicated region
        $region25: #{tpu_custom_call.1} parent=23 // pred_check
          %p144 = pneg %p37
        $region26: #{tpu_custom_call.1} parent=23 // pred_check_branch
          %146 = sbr.rel (%p144) target = $region28
        $region27: #{tpu_custom_call.1} parent=23 // pred_region
          %s147 = sand.u32 %s27, 1
          %s148 = scalar_lea.sflag [#allocation4], %s147
          %s149 = sand.u32 %s27, 1
          %s150 = smul.addr %s149, 8
          %s151 = scalar_lea.vmem [#allocation3], %s150
          %s152 = smul.u32 4, %s17
          %s154 = ssub.s32 128, 128
          %155 = vsyncadd %s148, %s154
          %s156 = smul.addr %s152, 32
          %s157 = scalar_lea.hbm %s0, %s156
          %s159 = sshll.u32 %s151, 4
          %s160 = int_to_ptr.vmem [resolvable:$true] %s159
          %162 = dma.hbm_to_vmem [thread:$0]  %s157, 128, %s160, %s148
        $region28: #{tpu_custom_call.1} parent=23 // pred_fallthru
          _
      $region24: #{tpu_custom_call.1} parent=5 // pred_fallthru
        _
      %p163 = scmp.le.s32.totalorder 1, %s17
      %p164 = scmp.lt.s32.totalorder %s17, 3
      %p165 = pnand %p163, %p164
      %p166 = pneg %p165
      // Predicated region
      $region29: #{tpu_custom_call.1} parent=5 // pred_check
        _
      $region30: #{tpu_custom_call.1} parent=5 // pred_check_branch
        %168 = sbr.rel (%p165) target = $region32
      $region31: #{tpu_custom_call.1} parent=5 // pred_region
        %s169 = ssub.s32 %s17, 1
        %s170 = sand.u32 %s30, 1
        %s171 = scalar_lea.sflag [#allocation4], %s170
        %s172 = sand.u32 %s30, 1
        %s173 = smul.addr %s172, 8
        %s174 = scalar_lea.vmem [#allocation3], %s173
        // Predicated region
        $region33: #{tpu_custom_call.1} parent=31 // pred_check
          %p175 = pneg %p43
        $region34: #{tpu_custom_call.1} parent=31 // pred_check_branch
          %177 = sbr.rel (%p175) target = $region36
        $region35: #{tpu_custom_call.1} parent=31 // pred_region
          %178 = dma.done %s171, 128
        $region36: #{tpu_custom_call.1} parent=31 // pred_fallthru
          _
        // Predicated region
        $region37: #{tpu_custom_call.1} parent=31 // pred_check
          %p179 = pneg %p64
        $region38: #{tpu_custom_call.1} parent=31 // pred_check_branch
          %181 = sbr.rel (%p179) target = $region40
        $region39: #{tpu_custom_call.1} parent=31 // pred_region
          %182 = dma.done [#allocation7], 64
        $region40: #{tpu_custom_call.1} parent=31 // pred_fallthru
          _
        %s183 = sand.u32 %s30, 1
        %s184 = scalar_lea.sflag [#allocation4], %s183
        %s185 = sand.u32 %s30, 1
        %s186 = smul.addr %s185, 8
        %s187 = scalar_lea.vmem [#allocation3], %s186
        %p188 = pneg %p43
        %p189 = pneg %p40
        %p190 = pneg %p64
        %p191 = pneg %p61
        %p192 = pneg %p85
        %p193 = pneg %p82
        %p194 = pneg %p111
        %p195 = pneg %p108
        %s196 = sand.u32 %s98, 1
        %s197 = scalar_lea.sflag [#allocation5], %s196
        %s198 = sand.u32 %s98, 1
        %s199 = smul.addr %s198, 4
        %s200 = scalar_lea.vmem [#allocation8], %s199
        %s201 = smul.u32 4, %s22
        %s202 = smul.u32 4, %s22
        %v203 = vld [vmem:[%s174] ss:$2 sm:$0xf]
        %s204 = scalar_lea.vmem %s174, 1 [#allocation3]
        %v205 = vld [vmem:[%s204] ss:$2 sm:$0xf]
        %v206 = vlaneseq
        %v207 = vshrl.u32 %v206, 7
        %v208 = vadd.s32 %v207, 8
        %v209 = vadd.s32 %v207, 16
        %v210 = vadd.s32 %v207, 24
        %v211 = vadd.s32 %v207, 32
        %v212 = vadd.s32 %v207, 40
        %v213 = vadd.s32 %v207, 48
        %v214 = vadd.s32 %v207, 56
        %v215 = vld [vmem:[#allocation6] sm:$0x7]
        %v216 = vlaneseq
        %v217 = vshrl.u32 %v216, 7
        %v218 = vsub.s32 0, %v217
        %v219 = vrot.slane %v203, %v218
        %v220 = vlaneseq
        %v221 = vshrl.u32 %v220, 7
        %v222 = vsub.s32 1, %v221
        %v223 = vrot.slane %v203, %v222
        %v224 = vlaneseq
        %v225 = vshrl.u32 %v224, 7
        %v226 = vsub.s32 2, %v225
        %v227 = vrot.slane %v203, %v226
        %v228 = vlaneseq
        %v229 = vshrl.u32 %v228, 7
        %v230 = vsub.s32 3, %v229
        %v231 = vrot.slane %v203, %v230
        %vm232 = vcmp.eq.s32.totalorder %v207, %v219
        %vm233 = vcmp.eq.s32.totalorder %v207, %v223
        %vm234 = vcmp.eq.s32.totalorder %v207, %v227
        %vm235 = vcmp.eq.s32.totalorder %v207, %v231
        %vm236 = vcmp.eq.s32.totalorder %v208, %v219
        %vm237 = vcmp.eq.s32.totalorder %v208, %v223
        %vm238 = vcmp.eq.s32.totalorder %v208, %v227
        %vm239 = vcmp.eq.s32.totalorder %v208, %v231
        %vm240 = vcmp.eq.s32.totalorder %v209, %v219
        %vm241 = vcmp.eq.s32.totalorder %v209, %v223
        %vm242 = vcmp.eq.s32.totalorder %v209, %v227
        %vm243 = vcmp.eq.s32.totalorder %v209, %v231
        %vm244 = vcmp.eq.s32.totalorder %v210, %v219
        %vm245 = vcmp.eq.s32.totalorder %v210, %v223
        %vm246 = vcmp.eq.s32.totalorder %v210, %v227
        %vm247 = vcmp.eq.s32.totalorder %v210, %v231
        %vm248 = vcmp.eq.s32.totalorder %v211, %v219
        %vm249 = vcmp.eq.s32.totalorder %v211, %v223
        %vm250 = vcmp.eq.s32.totalorder %v211, %v227
        %vm251 = vcmp.eq.s32.totalorder %v211, %v231
        %vm252 = vcmp.eq.s32.totalorder %v212, %v219
        %vm253 = vcmp.eq.s32.totalorder %v212, %v223
        %vm254 = vcmp.eq.s32.totalorder %v212, %v227
        %vm255 = vcmp.eq.s32.totalorder %v212, %v231
        %vm256 = vcmp.eq.s32.totalorder %v213, %v219
        %vm257 = vcmp.eq.s32.totalorder %v213, %v223
        %vm258 = vcmp.eq.s32.totalorder %v213, %v227
        %vm259 = vcmp.eq.s32.totalorder %v213, %v231
        %vm260 = vcmp.eq.s32.totalorder %v214, %v219
        %vm261 = vcmp.eq.s32.totalorder %v214, %v223
        %vm262 = vcmp.eq.s32.totalorder %v214, %v227
        %vm263 = vcmp.eq.s32.totalorder %v214, %v231
        %v264 = vsel %vm232, 1, 0
        %v265 = vsel %vm233, 1, 0
        %v266 = vsel %vm234, 1, 0
        %v267 = vsel %vm235, 1, 0
        %v268 = vsel %vm236, 1, 0
        %v269 = vsel %vm237, 1, 0
        %v270 = vsel %vm238, 1, 0
        %v271 = vsel %vm239, 1, 0
        %v272 = vsel %vm240, 1, 0
        %v273 = vsel %vm241, 1, 0
        %v274 = vsel %vm242, 1, 0
        %v275 = vsel %vm243, 1, 0
        %v276 = vsel %vm244, 1, 0
        %v277 = vsel %vm245, 1, 0
        %v278 = vsel %vm246, 1, 0
        %v279 = vsel %vm247, 1, 0
        %v280 = vsel %vm248, 1, 0
        %v281 = vsel %vm249, 1, 0
        %v282 = vsel %vm250, 1, 0
        %v283 = vsel %vm251, 1, 0
        %v284 = vsel %vm252, 1, 0
        %v285 = vsel %vm253, 1, 0
        %v286 = vsel %vm254, 1, 0
        %v287 = vsel %vm255, 1, 0
        %v288 = vsel %vm256, 1, 0
        %v289 = vsel %vm257, 1, 0
        %v290 = vsel %vm258, 1, 0
        %v291 = vsel %vm259, 1, 0
        %v292 = vsel %vm260, 1, 0
        %v293 = vsel %vm261, 1, 0
        %v294 = vsel %vm262, 1, 0
        %v295 = vsel %vm263, 1, 0
        %v296 = vcvt.s32.f32 %v264
        %v297 = vcvt.s32.f32 %v265
        %v298 = vcvt.s32.f32 %v266
        %v299 = vcvt.s32.f32 %v267
        %v300 = vcvt.s32.f32 %v268
        %v301 = vcvt.s32.f32 %v269
        %v302 = vcvt.s32.f32 %v270
        %v303 = vcvt.s32.f32 %v271
        %v304 = vcvt.s32.f32 %v272
        %v305 = vcvt.s32.f32 %v273
        %v306 = vcvt.s32.f32 %v274
        %v307 = vcvt.s32.f32 %v275
        %v308 = vcvt.s32.f32 %v276
        %v309 = vcvt.s32.f32 %v277
        %v310 = vcvt.s32.f32 %v278
        %v311 = vcvt.s32.f32 %v279
        %v312 = vcvt.s32.f32 %v280
        %v313 = vcvt.s32.f32 %v281
        %v314 = vcvt.s32.f32 %v282
        %v315 = vcvt.s32.f32 %v283
        %v316 = vcvt.s32.f32 %v284
        %v317 = vcvt.s32.f32 %v285
        %v318 = vcvt.s32.f32 %v286
        %v319 = vcvt.s32.f32 %v287
        %v320 = vcvt.s32.f32 %v288
        %v321 = vcvt.s32.f32 %v289
        %v322 = vcvt.s32.f32 %v290
        %v323 = vcvt.s32.f32 %v291
        %v324 = vcvt.s32.f32 %v292
        %v325 = vcvt.s32.f32 %v293
        %v326 = vcvt.s32.f32 %v294
        %v327 = vcvt.s32.f32 %v295
        %v328 = vlaneseq
        %v329 = vshrl.u32 %v328, 7
        %v330 = vsub.s32 0, %v329
        %v331 = vrot.slane %v205, %v330
        %v332 = vlaneseq
        %v333 = vshrl.u32 %v332, 7
        %v334 = vsub.s32 1, %v333
        %v335 = vrot.slane %v205, %v334
        %v336 = vlaneseq
        %v337 = vshrl.u32 %v336, 7
        %v338 = vsub.s32 2, %v337
        %v339 = vrot.slane %v205, %v338
        %v340 = vlaneseq
        %v341 = vshrl.u32 %v340, 7
        %v342 = vsub.s32 3, %v341
        %v343 = vrot.slane %v205, %v342
        %vm344 = vcmp.eq.s32.totalorder %v207, %v331
        %vm345 = vcmp.eq.s32.totalorder %v207, %v335
        %vm346 = vcmp.eq.s32.totalorder %v207, %v339
        %vm347 = vcmp.eq.s32.totalorder %v207, %v343
        %vm348 = vcmp.eq.s32.totalorder %v208, %v331
        %vm349 = vcmp.eq.s32.totalorder %v208, %v335
        %vm350 = vcmp.eq.s32.totalorder %v208, %v339
        %vm351 = vcmp.eq.s32.totalorder %v208, %v343
        %vm352 = vcmp.eq.s32.totalorder %v209, %v331
        %vm353 = vcmp.eq.s32.totalorder %v209, %v335
        %vm354 = vcmp.eq.s32.totalorder %v209, %v339
        %vm355 = vcmp.eq.s32.totalorder %v209, %v343
        %vm356 = vcmp.eq.s32.totalorder %v210, %v331
        %vm357 = vcmp.eq.s32.totalorder %v210, %v335
        %vm358 = vcmp.eq.s32.totalorder %v210, %v339
        %vm359 = vcmp.eq.s32.totalorder %v210, %v343
        %vm360 = vcmp.eq.s32.totalorder %v211, %v331
        %vm361 = vcmp.eq.s32.totalorder %v211, %v335
        %vm362 = vcmp.eq.s32.totalorder %v211, %v339
        %vm363 = vcmp.eq.s32.totalorder %v211, %v343
        %vm364 = vcmp.eq.s32.totalorder %v212, %v331
        %vm365 = vcmp.eq.s32.totalorder %v212, %v335
        %vm366 = vcmp.eq.s32.totalorder %v212, %v339
        %vm367 = vcmp.eq.s32.totalorder %v212, %v343
        %vm368 = vcmp.eq.s32.totalorder %v213, %v331
        %vm369 = vcmp.eq.s32.totalorder %v213, %v335
        %vm370 = vcmp.eq.s32.totalorder %v213, %v339
        %vm371 = vcmp.eq.s32.totalorder %v213, %v343
        %vm372 = vcmp.eq.s32.totalorder %v214, %v331
        %vm373 = vcmp.eq.s32.totalorder %v214, %v335
        %vm374 = vcmp.eq.s32.totalorder %v214, %v339
        %vm375 = vcmp.eq.s32.totalorder %v214, %v343
        %v376 = vsel %vm344, 1, 0
        %v377 = vsel %vm345, 1, 0
        %v378 = vsel %vm346, 1, 0
        %v379 = vsel %vm347, 1, 0
        %v380 = vsel %vm348, 1, 0
        %v381 = vsel %vm349, 1, 0
        %v382 = vsel %vm350, 1, 0
        %v383 = vsel %vm351, 1, 0
        %v384 = vsel %vm352, 1, 0
        %v385 = vsel %vm353, 1, 0
        %v386 = vsel %vm354, 1, 0
        %v387 = vsel %vm355, 1, 0
        %v388 = vsel %vm356, 1, 0
        %v389 = vsel %vm357, 1, 0
        %v390 = vsel %vm358, 1, 0
        %v391 = vsel %vm359, 1, 0
        %v392 = vsel %vm360, 1, 0
        %v393 = vsel %vm361, 1, 0
        %v394 = vsel %vm362, 1, 0
        %v395 = vsel %vm363, 1, 0
        %v396 = vsel %vm364, 1, 0
        %v397 = vsel %vm365, 1, 0
        %v398 = vsel %vm366, 1, 0
        %v399 = vsel %vm367, 1, 0
        %v400 = vsel %vm368, 1, 0
        %v401 = vsel %vm369, 1, 0
        %v402 = vsel %vm370, 1, 0
        %v403 = vsel %vm371, 1, 0
        %v404 = vsel %vm372, 1, 0
        %v405 = vsel %vm373, 1, 0
        %v406 = vsel %vm374, 1, 0
        %v407 = vsel %vm375, 1, 0
        %v408 = vcvt.s32.f32 %v376
        %v409 = vcvt.s32.f32 %v377
        %v410 = vcvt.s32.f32 %v378
        %v411 = vcvt.s32.f32 %v379
        %v412 = vcvt.s32.f32 %v380
        %v413 = vcvt.s32.f32 %v381
        %v414 = vcvt.s32.f32 %v382
        %v415 = vcvt.s32.f32 %v383
        %v416 = vcvt.s32.f32 %v384
        %v417 = vcvt.s32.f32 %v385
        %v418 = vcvt.s32.f32 %v386
        %v419 = vcvt.s32.f32 %v387
        %v420 = vcvt.s32.f32 %v388
        %v421 = vcvt.s32.f32 %v389
        %v422 = vcvt.s32.f32 %v390
        %v423 = vcvt.s32.f32 %v391
        %v424 = vcvt.s32.f32 %v392
        %v425 = vcvt.s32.f32 %v393
        %v426 = vcvt.s32.f32 %v394
        %v427 = vcvt.s32.f32 %v395
        %v428 = vcvt.s32.f32 %v396
        %v429 = vcvt.s32.f32 %v397
        %v430 = vcvt.s32.f32 %v398
        %v431 = vcvt.s32.f32 %v399
        %v432 = vcvt.s32.f32 %v400
        %v433 = vcvt.s32.f32 %v401
        %v434 = vcvt.s32.f32 %v402
        %v435 = vcvt.s32.f32 %v403
        %v436 = vcvt.s32.f32 %v404
        %v437 = vcvt.s32.f32 %v405
        %v438 = vcvt.s32.f32 %v406
        %v439 = vcvt.s32.f32 %v407
        %v440 = vsub.f32 %v296, %v408
        %v441 = vsub.f32 %v297, %v409
        %v442 = vsub.f32 %v298, %v410
        %v443 = vsub.f32 %v299, %v411
        %v444 = vsub.f32 %v300, %v412
        %v445 = vsub.f32 %v301, %v413
        %v446 = vsub.f32 %v302, %v414
        %v447 = vsub.f32 %v303, %v415
        %v448 = vsub.f32 %v304, %v416
        %v449 = vsub.f32 %v305, %v417
        %v450 = vsub.f32 %v306, %v418
        %v451 = vsub.f32 %v307, %v419
        %v452 = vsub.f32 %v308, %v420
        %v453 = vsub.f32 %v309, %v421
        %v454 = vsub.f32 %v310, %v422
        %v455 = vsub.f32 %v311, %v423
        %v456 = vsub.f32 %v312, %v424
        %v457 = vsub.f32 %v313, %v425
        %v458 = vsub.f32 %v314, %v426
        %v459 = vsub.f32 %v315, %v427
        %v460 = vsub.f32 %v316, %v428
        %v461 = vsub.f32 %v317, %v429
        %v462 = vsub.f32 %v318, %v430
        %v463 = vsub.f32 %v319, %v431
        %v464 = vsub.f32 %v320, %v432
        %v465 = vsub.f32 %v321, %v433
        %v466 = vsub.f32 %v322, %v434
        %v467 = vsub.f32 %v323, %v435
        %v468 = vsub.f32 %v324, %v436
        %v469 = vsub.f32 %v325, %v437
        %v470 = vsub.f32 %v326, %v438
        %v471 = vsub.f32 %v327, %v439
        %vm472 = vcmask 523264
        %v474 = vsel %vm472, %v215, 0
        %476 = vmatprep.subr.mxu0 0.0
        %477 = vmatpush1.msra.mxu0 0.0
        %478 = vmatprep.subr.mxu0 0.0
        %479 = vmatpush1.msra.mxu0 0.0
        %480 = vmatprep.subr.mxu0 0.0
        %481 = vmatpush1.msra.mxu0 0.0
        %482 = vmatprep.subr.mxu0 0.0
        %483 = vmatpush1.msra.mxu0 0.0
        %484 = vmatprep.subr.mxu0 0.0
        %485 = vmatpush1.msra.mxu0 0.0
        %486 = vmatprep.subr.mxu0 0.0
        %487 = vmatpush1.msra.mxu0 0.0
        %488 = vmatprep.subr.mxu0 0.0
        %489 = vmatpush1.msra.mxu0 0.0
        %490 = vmatprep.subr.mxu0 0.0
        %491 = vmatpush1.msra.mxu0 0.0
        %492 = vmatprep.subr.mxu0 %v469
        %493 = vmatpush1.msra.mxu0 %v468
        %494 = vmatprep.subr.mxu0 %v465
        %495 = vmatpush1.msra.mxu0 %v464
        %496 = vmatprep.subr.mxu0 %v461
        %497 = vmatpush1.msra.mxu0 %v460
        %498 = vmatprep.subr.mxu0 %v457
        %499 = vmatpush1.msra.mxu0 %v456
        %500 = vmatprep.subr.mxu0 %v453
        %501 = vmatpush1.msra.mxu0 %v452
        %502 = vmatprep.subr.mxu0 %v449
        %503 = vmatpush1.msra.mxu0 %v448
        %504 = vmatprep.subr.mxu0 %v445
        %505 = vmatpush1.msra.mxu0 %v444
        %506 = vmatprep.subr.mxu0 %v441
        %507 = vmatpush1.msra.mxu0 %v440
        %508 = vmatprep.subr.mxu0 0.0
        %509 = vmatpush2.msra.mxu0 0.0
        %510 = vmatprep.subr.mxu0 0.0
        %511 = vmatpush2.msra.mxu0 0.0
        %512 = vmatprep.subr.mxu0 0.0
        %513 = vmatpush2.msra.mxu0 0.0
        %514 = vmatprep.subr.mxu0 0.0
        %515 = vmatpush2.msra.mxu0 0.0
        %516 = vmatprep.subr.mxu0 0.0
        %517 = vmatpush2.msra.mxu0 0.0
        %518 = vmatprep.subr.mxu0 0.0
        %519 = vmatpush2.msra.mxu0 0.0
        %520 = vmatprep.subr.mxu0 0.0
        %521 = vmatpush2.msra.mxu0 0.0
        %522 = vmatprep.subr.mxu0 0.0
        %523 = vmatpush2.msra.mxu0 0.0
        %524 = vmatprep.subr.mxu0 0.0
        %525 = vmatpush2.msra.mxu0 0.0
        %526 = vmatprep.subr.mxu0 0.0
        %527 = vmatpush2.msra.mxu0 0.0
        %528 = vmatprep.subr.mxu0 0.0
        %529 = vmatpush2.msra.mxu0 0.0
        %530 = vmatprep.subr.mxu0 0.0
        %531 = vmatpush2.msra.mxu0 0.0
        %532 = vmatprep.subr.mxu0 0.0
        %533 = vmatpush2.msra.mxu0 0.0
        %534 = vmatprep.subr.mxu0 0.0
        %535 = vmatpush2.msra.mxu0 0.0
        %536 = vmatprep.subr.mxu0 0.0
        %537 = vmatpush2.msra.mxu0 0.0
        %538 = vmatprep.subr.mxu0 0.0
        %539 = vmatpush2.msra.mxu0 0.0
        %540 = vmatprep.mubr.f32.mxu0 0.0
        %541 = vmatmul.mubr.f32.gmra.mxu0 %v474
        %v542 = vpop.f32.mrf.mxu0
        %v543 = vadd.f32 0.0, %v542
        %v544 = vpop.f32.mrf.mxu0
        %v545 = vadd.f32 0.0, %v544
        %546 = vdwg.mxu0
        %547 = vmatprep.subr.mxu0 0.0
        %548 = vmatpush1.msra.mxu0 0.0
        %549 = vmatprep.subr.mxu0 0.0
        %550 = vmatpush1.msra.mxu0 0.0
        %551 = vmatprep.subr.mxu0 0.0
        %552 = vmatpush1.msra.mxu0 0.0
        %553 = vmatprep.subr.mxu0 0.0
        %554 = vmatpush1.msra.mxu0 0.0
        %555 = vmatprep.subr.mxu0 0.0
        %556 = vmatpush1.msra.mxu0 0.0
        %557 = vmatprep.subr.mxu0 0.0
        %558 = vmatpush1.msra.mxu0 0.0
        %559 = vmatprep.subr.mxu0 0.0
        %560 = vmatpush1.msra.mxu0 0.0
        %561 = vmatprep.subr.mxu0 0.0
        %562 = vmatpush1.msra.mxu0 0.0
        %563 = vmatprep.subr.mxu0 %v471
        %564 = vmatpush1.msra.mxu0 %v470
        %565 = vmatprep.subr.mxu0 %v467
        %566 = vmatpush1.msra.mxu0 %v466
        %567 = vmatprep.subr.mxu0 %v463
        %568 = vmatpush1.msra.mxu0 %v462
        %569 = vmatprep.subr.mxu0 %v459
        %570 = vmatpush1.msra.mxu0 %v458
        %571 = vmatprep.subr.mxu0 %v455
        %572 = vmatpush1.msra.mxu0 %v454
        %573 = vmatprep.subr.mxu0 %v451
        %574 = vmatpush1.msra.mxu0 %v450
        %575 = vmatprep.subr.mxu0 %v447
        %576 = vmatpush1.msra.mxu0 %v446
        %577 = vmatprep.subr.mxu0 %v443
        %578 = vmatpush1.msra.mxu0 %v442
        %579 = vmatprep.subr.mxu0 0.0
        %580 = vmatpush2.msra.mxu0 0.0
        %581 = vmatprep.subr.mxu0 0.0
        %582 = vmatpush2.msra.mxu0 0.0
        %583 = vmatprep.subr.mxu0 0.0
        %584 = vmatpush2.msra.mxu0 0.0
        %585 = vmatprep.subr.mxu0 0.0
        %586 = vmatpush2.msra.mxu0 0.0
        %587 = vmatprep.subr.mxu0 0.0
        %588 = vmatpush2.msra.mxu0 0.0
        %589 = vmatprep.subr.mxu0 0.0
        %590 = vmatpush2.msra.mxu0 0.0
        %591 = vmatprep.subr.mxu0 0.0
        %592 = vmatpush2.msra.mxu0 0.0
        %593 = vmatprep.subr.mxu0 0.0
        %594 = vmatpush2.msra.mxu0 0.0
        %595 = vmatprep.subr.mxu0 0.0
        %596 = vmatpush2.msra.mxu0 0.0
        %597 = vmatprep.subr.mxu0 0.0
        %598 = vmatpush2.msra.mxu0 0.0
        %599 = vmatprep.subr.mxu0 0.0
        %600 = vmatpush2.msra.mxu0 0.0
        %601 = vmatprep.subr.mxu0 0.0
        %602 = vmatpush2.msra.mxu0 0.0
        %603 = vmatprep.subr.mxu0 0.0
        %604 = vmatpush2.msra.mxu0 0.0
        %605 = vmatprep.subr.mxu0 0.0
        %606 = vmatpush2.msra.mxu0 0.0
        %607 = vmatprep.subr.mxu0 0.0
        %608 = vmatpush2.msra.mxu0 0.0
        %609 = vmatprep.subr.mxu0 0.0
        %610 = vmatpush2.msra.mxu0 0.0
        %611 = vmatprep.mubr.f32.mxu0 0.0
        %612 = vmatmul.mubr.f32.gmra.mxu0 %v474
        %v613 = vpop.f32.mrf.mxu0
        %v614 = vadd.f32 0.0, %v613
        %v615 = vpop.f32.mrf.mxu0
        %v616 = vadd.f32 0.0, %v615
        %617 = vdwg.mxu0
        %v618 = vmul.f32 %v543, %v543
        %v619 = vmul.f32 %v545, %v545
        %v620 = vmul.f32 %v614, %v614
        %v621 = vmul.f32 %v616, %v616
        %vm622 = vcmask 1042432
        %v623 = vsel %vm622, %v618, 0.0
        %v624 = vrot.slane %v623, 4
        %v625 = vadd.f32 %v623, %v624
        %v626 = vrot.slane %v625, 2
        %v627 = vadd.f32 %v625, %v626
        %v628 = vrot.slane %v627, 1
        %v629 = vadd.f32 %v627, %v628
        %v630 = vsel %vm622, %v619, 0.0
        %v631 = vrot.slane %v630, 4
        %v632 = vadd.f32 %v630, %v631
        %v633 = vrot.slane %v632, 2
        %v634 = vadd.f32 %v632, %v633
        %v635 = vrot.slane %v634, 1
        %v636 = vadd.f32 %v634, %v635
        %v637 = vsel %vm622, %v620, 0.0
        %v638 = vrot.slane %v637, 4
        %v639 = vadd.f32 %v637, %v638
        %v640 = vrot.slane %v639, 2
        %v641 = vadd.f32 %v639, %v640
        %v642 = vrot.slane %v641, 1
        %v643 = vadd.f32 %v641, %v642
        %v644 = vsel %vm622, %v621, 0.0
        %v645 = vrot.slane %v644, 4
        %v646 = vadd.f32 %v644, %v645
        %v647 = vrot.slane %v646, 2
        %v648 = vadd.f32 %v646, %v647
        %v649 = vrot.slane %v648, 1
        %v650 = vadd.f32 %v648, %v649
        %s651 = sld [smem:[#allocation2]]
        %v652 = vstv %s651
        %v653 = vmul.f32 %v652, %v629
        %v654 = vmul.f32 %v652, %v636
        %v655 = vmul.f32 %v652, %v643
        %v656 = vmul.f32 %v652, %v650
        %v657 = vsub.f32 0.0, %v653
        %v658 = vsub.f32 0.0, %v654
        %v659 = vsub.f32 0.0, %v655
        %v660 = vsub.f32 0.0, %v656
        %v661 = vmul.f32 %v657, 1.442695
        %v662 = vpow.pop %v661
        %v663 = vmul.f32 %v658, 1.442695
        %v664 = vpow.pop %v663
        %v665 = vmul.f32 %v659, 1.442695
        %v666 = vpow.pop %v665
        %v667 = vmul.f32 %v660, 1.442695
        %v668 = vpow.pop %v667
        %v673 = vcombine.low %v662, %v664
        %v674 = vcombine.low %v666, %v668
        %v676 = vunpack.c.l.s4 1966171168
        %v677 = vunpack.c.0.s8 %v676
        %v678 = vlaneseq
        %v679 = vshrl.u32 %v678, 7
        %v680 = vsub.s32 %v677, %v679
        %v681 = vrot.slane %v673, %v680
        %v683 = vunpack.c.l.s4 1966171168
        %v684 = vunpack.c.0.s8 %v683
        %v685 = vlaneseq
        %v686 = vshrl.u32 %v685, 7
        %v687 = vsub.s32 %v684, %v686
        %v688 = vrot.slane %v674, %v687
        %v689 = vcombine.low %v681, %v688
        %v691 = vunpack.c.l.s4 1966171168
        %v692 = vunpack.c.0.s8 %v691
        %v693 = vlaneseq
        %v694 = vshrl.u32 %v693, 7
        %v695 = vsub.s32 %v692, %v694
        %v696 = vrot.slane %v689, %v695
        %v698 = vlaneseq
        %vm699 = vcmp.ge.s32.totalorder %v698, 0
        %vm700 = vcmp.lt.s32.totalorder %v698, 512
        %vm701 = vmand %vm699, %vm700
        %702 = vst.msk [vmem:[%s200] sm:$0xf] %vm701, %v696
        %s703 = sand.u32 %s98, 1
        %s704 = scalar_lea.sflag [#allocation5], %s703
        %s705 = sand.u32 %s98, 1
        %s706 = smul.addr %s705, 4
        %s707 = scalar_lea.vmem [#allocation8], %s706
        // Predicated region
        $region41: #{tpu_custom_call.1} parent=31 // pred_check
          %p708 = pneg %p108
        $region42: #{tpu_custom_call.1} parent=31 // pred_check_branch
          %710 = sbr.rel (%p708) target = $region44
        $region43: #{tpu_custom_call.1} parent=31 // pred_region
          %s711 = smul.u32 4, %s22
          %s713 = ssub.s32 64, 64
          %714 = vsyncadd %s704, %s713
          %s715 = smul.addr %s711, 16
          %s716 = scalar_lea.hbm %s3, %s715
          %s718 = sshll.u32 %s707, 4
          %s719 = int_to_ptr.vmem [resolvable:$true] %s718
          %721 = dma.vmem_to_hbm [thread:$0]  %s719, 64, %s716, %s704
        $region44: #{tpu_custom_call.1} parent=31 // pred_fallthru
          _
      $region32: #{tpu_custom_call.1} parent=5 // pred_fallthru
        _
      %p722 = scmp.le.s32.totalorder 2, %s17
      // Predicated region
      $region45: #{tpu_custom_call.1} parent=5 // pred_check
        %p723 = pneg %p722
      $region46: #{tpu_custom_call.1} parent=5 // pred_check_branch
        %725 = sbr.rel (%p723) target = $region48
      $region47: #{tpu_custom_call.1} parent=5 // pred_region
        %s726 = ssub.s32 %s17, 2
        // Predicated region
        $region49: #{tpu_custom_call.1} parent=47 // pred_check
          %p727 = pneg %p114
        $region50: #{tpu_custom_call.1} parent=47 // pred_check_branch
          %729 = sbr.rel (%p727) target = $region52
        $region51: #{tpu_custom_call.1} parent=47 // pred_region
          %s730 = sand.u32 %s99, 1
          %s731 = scalar_lea.sflag [#allocation5], %s730
          %s732 = sand.u32 %s99, 1
          %s733 = smul.addr %s732, 4
          %s734 = scalar_lea.vmem [#allocation8], %s733
          %735 = dma.done %s731, 64
        $region52: #{tpu_custom_call.1} parent=47 // pred_fallthru
          _
      $region48: #{tpu_custom_call.1} parent=5 // pred_fallthru
        _
    $region6: #{tpu_custom_call.1} parent=1 // loop_footer
      %s21 = sadd.s32 1, %s17
    $region7: #{tpu_custom_call.1} parent=1 // loop_footer_branch
      %16 = sbr.rel target = $region3
    $region8: #{tpu_custom_call.1} parent=1 // loop_exit
      _
    %736 = vsyncpa [#allocation4], 1
    %s737 = scalar_lea.sflag [#allocation4], 1
    %738 = vsyncpa %s737, 1
    %739 = vsyncpa [#allocation7], 1
    %740 = vsyncpa [#allocation5], 1
    %s741 = scalar_lea.sflag [#allocation5], 1
    %742 = vsyncpa %s741, 1

</llo_original>
